<compile_context>
chip_gen: v7x
topology: tpu7x:2x2x1
jax: 0.10.0
libtpu: 0.0.40
codegen_flags: <defaults>
</compile_context>

<pallas_src>
import functools
import math

import jax
import jax.numpy as jnp
from jax import lax
from jax.experimental import pallas as pl
from jax.experimental.pallas import tpu as pltpu

_SQRT_HALF = 0.7071067811865475
_TANH_C0 = 0.7978845608028654    # sqrt(2/pi)
_TANH_C1 = 0.044715


def _gelu(z, approximate):
    if approximate:
        # tanh form routes to the EUP (separate VLIW slot) -> cheaper than the
        # erf polynomial on the VALU.  Not bit-identical to torch F.gelu.
        return 0.5 * z * (1.0 + jnp.tanh(_TANH_C0 * (z + _TANH_C1 * z * z * z)))
    # Exact erf form == torch.nn.functional.gelu default.
    return 0.5 * z * (1.0 + lax.erf(z * _SQRT_HALF))


# ------------------------------- kernels ------------------------------------
# TODO(synk): dropout is identity in eval mode; training-mode masking
# (pltpu.prng_random_bits) is intentionally not implemented.

def _wx_kernel(x_ref, w_ref, b_ref, o_ref, *, approximate):
    # x_ref: (D, TU) slab of one (batch, mode) group, U on the lane axis.
    # w_ref: (D, D) PyTorch (out, in) layout  ->  y = W @ x + b.
    z = jnp.dot(w_ref[...], x_ref[...], preferred_element_type=jnp.float32)
    o_ref[...] = _gelu(z + b_ref[...], approximate).astype(o_ref.dtype)


def _wx_acc_kernel(x_ref, w_ref, b_ref, o_ref, acc_ref, *, approximate):
    # K-tiled variant: grid axis 2 walks the contraction dimension.
    @pl.when(pl.program_id(2) == 0)
    def _():
        acc_ref[...] = jnp.zeros_like(acc_ref)

    acc_ref[...] += jnp.dot(w_ref[...], x_ref[...],
                            preferred_element_type=jnp.float32)

    @pl.when(pl.program_id(2) == pl.num_programs(2) - 1)
    def _():
        o_ref[...] = _gelu(acc_ref[...] + b_ref[...],
                           approximate).astype(o_ref.dtype)


def _wx_group_kernel(x_ref, w_ref, b_ref, o_ref, *, approximate, gt):
    # Small-U path: x_ref is (GT, D, U) -- GT (batch, mode) groups per step.
    w = w_ref[...]
    b = b_ref[...]
    for g in range(gt):                 # GT <= 16 -> static unroll.
        z = jnp.dot(w, x_ref[g], preferred_element_type=jnp.float32)
        o_ref[g] = _gelu(z + b, approximate).astype(o_ref.dtype)


_DN_RHS_T = (((1,), (1,)), ((), ()))    # contract x dim 1 with W dim 1 (W is (out,in))


def _xw_kernel(x_ref, w_ref, b_ref, o_ref, *, approximate):
    # x_ref: (TR, D) rows; w_ref: (Dout, D) (out, in) layout -> no transpose.
    z = lax.dot_general(x_ref[...], w_ref[...], _DN_RHS_T,
                        preferred_element_type=jnp.float32)
    o_ref[...] = _gelu(z + b_ref[...], approximate).astype(o_ref.dtype)


def _xw_acc_kernel(x_ref, w_ref, b_ref, o_ref, acc_ref, *, approximate):
    @pl.when(pl.program_id(1) == 0)
    def _():
        acc_ref[...] = jnp.zeros_like(acc_ref)

    acc_ref[...] += lax.dot_general(x_ref[...], w_ref[...], _DN_RHS_T,
                                    preferred_element_type=jnp.float32)

    @pl.when(pl.program_id(1) == pl.num_programs(1) - 1)
    def _():
        o_ref[...] = _gelu(acc_ref[...] + b_ref[...],
                           approximate).astype(o_ref.dtype)


# --------------------------- sizing heuristics -------------------------------

def _vmem_capacity_bytes():
    """Physical VMEM per TensorCore; conservative fallback if unqueryable."""
    try:
        cap = int(pltpu.get_tpu_info().vmem_capacity_bytes)
        if cap > 0:
            return cap
    except Exception:
        pass
    return 64 << 20           # v7x per-core size: safe lower bound everywhere


def _budgets(cap):
    tile_budget = min(32 << 20, cap // 4)     # x + out double-buffers
    weight_budget = min(8 << 20, cap // 8)    # double-buffered weight tile
    return tile_budget, weight_budget


def _compiler_params(dims, need_bytes, cap):
    limit = min(max(need_bytes, 24 << 20), (cap * 3) // 5)
    limit = max(limit, need_bytes)            # never clamp below requirement
    return pltpu.CompilerParams(dimension_semantics=dims,
                                vmem_limit_bytes=int(limit))


def _pick_k_tile(D, w_bytes, weight_budget, k_tile):
    """Contraction tile: a multiple of 128 that divides D, or full D."""
    if (k_tile is not None and 0 < int(k_tile) < D
            and D % int(k_tile) == 0 and int(k_tile) % 128 == 0):
        return int(k_tile)
    if D % 128 != 0 or 2 * D * D * w_bytes <= weight_budget:
        return D
    tk = (weight_budget // (2 * D * w_bytes)) // 128 * 128
    tk = min(max(tk, 128), D)
    while D % tk != 0:
        tk -= 128
    return max(tk, 128)


def _pick_u_tile(U, D, TK, x_bytes, o_bytes, w_bytes, use_acc, tile_budget):
    """Lane-axis tile for the (D, U) layout: multiple of 256/128, or full U."""
    if U <= 128:
        return int(U)
    fixed = 2 * D * TK * w_bytes + 2 * D * 4 + (1 << 20)
    per_col = 2 * TK * x_bytes + 2 * D * o_bytes + (4 * D if use_acc else 0)
    avail = max(tile_budget - fixed, 1 << 20)
    tu = min(avail // per_col, 4096)
    tu = (tu // 256) * 256 if tu >= 256 else 128
    if U <= tu:
        return int(U)
    return int(max(tu, 128))


def _pick_row_tile(rows, d_out, TK, x_bytes, o_bytes, w_bytes, use_acc,
                   tile_budget):
    """Row tile for the (rows, D) layout: multiple of 256/8, or full rows."""
    fixed = 2 * d_out * TK * w_bytes + 2 * d_out * 4 + (1 << 20)
    per_row = 2 * TK * x_bytes + 2 * d_out * o_bytes + (4 * d_out if use_acc else 0)
    avail = max(tile_budget - fixed, 1 << 20)
    tr = min(avail // per_row, 2048)
    tr = (tr // 256) * 256 if tr >= 256 else max((tr // 8) * 8, 8)
    if rows <= tr:
        return int(rows)
    return int(tr)


def _pick_group_tile(G, D, U, x_bytes, o_bytes, tile_budget):
    per_group = max(2 * D * U * (x_bytes + o_bytes), 1)
    gt = min(tile_budget // per_group, max(512 // max(U, 1), 1), 16, G)
    return int(max(gt, 1))


# --------------------------------- wrapper -----------------------------------

def mm_shared_mid(x, weight, bias, *, num_modes, feat_dim,
                  approximate_gelu=False, k_tile=None):
    """Pallas implementation of MMSharedMid.forward (inference / eval mode).

    weight: (feat_dim, feat_dim) in PyTorch nn.Linear (out, in) convention.
    bias:   (feat_dim,)
    """
    D = feat_dim
    ix = jnp.dtype(x.dtype).itemsize
    io = ix
    iw = jnp.dtype(weight.dtype).itemsize
    ib = jnp.dtype(bias.dtype).itemsize
    cap = _vmem_capacity_bytes()
    tile_budget, weight_budget = _budgets(cap)

    if x.ndim == 3:
        B, C, U = x.shape
        assert C == num_modes * D
        G = B * num_modes
        x3 = x.reshape(G, D, U)               # free view; U stays on lanes
        b_col = bias.reshape(D, 1)

        TK = _pick_k_tile(D, iw, weight_budget, k_tile)
        nk = D // TK

        ce = pl.CostEstimate(
            flops=int(2 * G * D * D * U),
            transcendentals=int(G * D * U),
            bytes_accessed=int(G * D * U * (ix + io) + D * D * iw + D * ib))

        if U < 128 and nk == 1:
            # Tiny lane extent: batch GT groups per grid step to amortize the
            # ~0.35us/step overhead and improve DMA burst size.
            GT = _pick_group_tile(G, D, U, ix, io, tile_budget)
            need = (2 * GT * D * U * (ix + io) + 2 * D * D * iw + 2 * D * ib
                    + (2 << 20))
            out3 = pl.pallas_call(
                functools.partial(_wx_group_kernel,
                                  approximate=approximate_gelu, gt=GT),
                out_shape=jax.ShapeDtypeStruct((G, D, U), x.dtype),
                grid_spec=pltpu.PrefetchScalarGridSpec(
                    num_scalar_prefetch=0,
                    grid=(pl.cdiv(G, GT),),
                    in_specs=[
                        pl.BlockSpec((GT, D, U), lambda i: (i, 0, 0)),
                        pl.BlockSpec((D, D), lambda i: (0, 0)),
                        pl.BlockSpec((D, 1), lambda i: (0, 0)),
                    ],
                    out_specs=pl.BlockSpec((GT, D, U), lambda i: (i, 0, 0)),
                ),
                compiler_params=_compiler_params(("parallel",), need, cap),
                cost_estimate=ce,
            )(x3, weight, b_col)
            return out3.reshape(B, C, U)

        TU = _pick_u_tile(U, D, TK, ix, io, iw, nk > 1, tile_budget)
        need = (2 * TK * TU * ix + 2 * D * TU * io + 2 * D * TK * iw
                + 2 * D * ib + (4 * D * TU if nk > 1 else 0) + (2 << 20))
        if nk > 1:
            kernel = functools.partial(_wx_acc_kernel,
                                       approximate=approximate_gelu)
            scratch = [pltpu.VMEM((D, TU), jnp.float32)]
        else:
            kernel = functools.partial(_wx_kernel,
                                       approximate=approximate_gelu)
            scratch = []

        out3 = pl.pallas_call(
            kernel,
            out_shape=jax.ShapeDtypeStruct((G, D, U), x.dtype),
            grid_spec=pltpu.PrefetchScalarGridSpec(
                num_scalar_prefetch=0,
                grid=(G, pl.cdiv(U, TU), nk),
                in_specs=[
                    pl.BlockSpec((None, TK, TU), lambda g, u, k: (g, k, u)),
                    pl.BlockSpec((D, TK), lambda g, u, k: (0, k)),
                    pl.BlockSpec((D, 1), lambda g, u, k: (0, 0)),
                ],
                out_specs=pl.BlockSpec((None, D, TU),
                                       lambda g, u, k: (g, 0, u)),
                scratch_shapes=scratch,
            ),
            compiler_params=_compiler_params(
                ("parallel", "parallel", "arbitrary"), need, cap),
            cost_estimate=ce,
        )(x3, weight, b_col)
        return out3.reshape(B, C, U)

    # 4-D path: (B, num_modes, U, D) -> feat_dim already last; y = x @ W^T + b.
    assert x.ndim == 4 and x.shape[-1] == D and x.shape[1] == num_modes
    B, M, U, _ = x.shape
    rows = B * M * U
    x2 = x.reshape(rows, D)
    w = weight                                  # (out, in): contract on axis 1
    b_row = bias.reshape(1, D)
    d_out = D

    TK = _pick_k_tile(D, iw, weight_budget, k_tile)
    nk = D // TK

    if D < 128:
        # Lane-dense output: fold `kf` rows into one so the store width is a
        # multiple of 128 (unmasked vst).  Weight becomes block-diagonal
        # kron(I_kf, W); numerics are unchanged.
        kf = 128 // math.gcd(D, 128)
        if kf > 1 and rows % kf == 0:
            rows //= kf
            d_out = kf * D
            x2 = x2.reshape(rows, d_out)        # free row-major view
            w = jnp.kron(jnp.eye(kf, dtype=weight.dtype), weight)
            b_row = jnp.tile(bias, kf).reshape(1, d_out)
            TK, nk = d_out, 1

    TR = _pick_row_tile(rows, d_out, TK, ix, io, iw, nk > 1, tile_budget)
    need = (2 * TR * TK * ix + 2 * TR * d_out * io + 2 * d_out * TK * iw
            + 2 * d_out * ib + (4 * TR * d_out if nk > 1 else 0) + (2 << 20))
    if nk > 1:
        kernel = functools.partial(_xw_acc_kernel, approximate=approximate_gelu)
        scratch = [pltpu.VMEM((TR, d_out), jnp.float32)]
    else:
        kernel = functools.partial(_xw_kernel, approximate=approximate_gelu)
        scratch = []

    ce = pl.CostEstimate(
        flops=int(2 * B * M * U * D * D),
        transcendentals=int(B * M * U * D),
        bytes_accessed=int(B * M * U * D * (ix + io) + D * D * iw + D * ib))

    out2 = pl.pallas_call(
        kernel,
        out_shape=jax.ShapeDtypeStruct((rows, d_out), x.dtype),
        grid_spec=pltpu.PrefetchScalarGridSpec(
            num_scalar_prefetch=0,
            grid=(pl.cdiv(rows, TR), nk),
            in_specs=[
                pl.BlockSpec((TR, TK), lambda i, k: (i, k)),
                pl.BlockSpec((d_out, TK), lambda i, k: (0, k)),
                pl.BlockSpec((1, d_out), lambda i, k: (0, 0)),
            ],
            out_specs=pl.BlockSpec((TR, d_out), lambda i, k: (i, 0)),
            scratch_shapes=scratch,
        ),
        compiler_params=_compiler_params(("parallel", "arbitrary"), need, cap),
        cost_estimate=ce,
    )(x2, w, b_row)
    return out2.reshape(B, M, U, D)


# ------------------------------- reference -----------------------------------

def _reference(x, weight, bias, *, num_modes, feat_dim, approximate_gelu=False):
    """Pure-JAX reference mirroring the PyTorch forward (eval mode)."""
    if x.ndim == 3:
        B, C, U = x.shape
        x4 = x.reshape(B, num_modes, feat_dim, U).transpose(0, 1, 3, 2)
    else:
        x4 = x
    z = jnp.einsum('bmud,od->bmuo', x4.astype(jnp.float32),
                   weight.astype(jnp.float32)) + bias.astype(jnp.float32)
    g = _gelu(z, approximate_gelu)
    if x.ndim == 3:
        g = g.transpose(0, 1, 3, 2).reshape(x.shape)
    return g


if __name__ == "__main__":
    def check(out, ref, atol, rtol, tag):
        assert out.shape == ref.shape, tag
        ok = jnp.allclose(out.astype(jnp.float32), ref.astype(jnp.float32),
                          atol=atol, rtol=rtol)
        assert bool(ok), tag

    # ---- Config A: toy shapes (feat_dim < 128, U < 128) ---------------------
    num_modes, feat_dim = 2, 32
    B, U = 2, 8
    k0, k1, k2, k3 = jax.random.split(jax.random.PRNGKey(0), 4)
    bound = 1.0 / math.sqrt(feat_dim)
    wA = jax.random.uniform(k2, (feat_dim, feat_dim), minval=-bound,
                            maxval=bound, dtype=jnp.float32)
    bA = jax.random.uniform(k3, (feat_dim,), minval=-bound, maxval=bound,
                            dtype=jnp.float32)
    x3 = jax.random.normal(k0, (B, num_modes * feat_dim, U), dtype=jnp.float32)
    x4 = jax.random.normal(k1, (B, num_modes, U, feat_dim), dtype=jnp.float32)

    fnA = jax.jit(functools.partial(mm_shared_mid, num_modes=num_modes,
                                    feat_dim=feat_dim))
    outA3 = jax.block_until_ready(fnA(x3, wA, bA))
    check(outA3, _reference(x3, wA, bA, num_modes=num_modes,
                            feat_dim=feat_dim), 1e-5, 1e-5, "A3")
    outA4 = jax.block_until_ready(fnA(x4, wA, bA))
    check(outA4, _reference(x4, wA, bA, num_modes=num_modes,
                            feat_dim=feat_dim), 1e-5, 1e-5, "A4")

    # ---- Config B: feat_dim >= 128 with forced K-tiling ----------------------
    num_modes_b, feat_dim_b = 2, 256
    Bb, Ub = 1, 256
    k4, k5, k6, k7 = jax.random.split(jax.random.PRNGKey(1), 4)
    boundb = 1.0 / math.sqrt(feat_dim_b)
    wB = jax.random.uniform(k6, (feat_dim_b, feat_dim_b), minval=-boundb,
                            maxval=boundb, dtype=jnp.float32)
    bB = jax.random.uniform(k7, (feat_dim_b,), minval=-boundb, maxval=boundb,
                            dtype=jnp.float32)
    xB3 = jax.random.normal(k4, (Bb, num_modes_b * feat_dim_b, Ub),
                            dtype=jnp.float32)
    xB4 = jax.random.normal(k5, (Bb, num_modes_b, 16, feat_dim_b),
                            dtype=jnp.float32)
    fnB = jax.jit(functools.partial(mm_shared_mid, num_modes=num_modes_b,
                                    feat_dim=feat_dim_b, k_tile=128))
    outB3 = jax.block_until_ready(fnB(xB3, wB, bB))
    check(outB3, _reference(xB3, wB, bB, num_modes=num_modes_b,
                            feat_dim=feat_dim_b), 1e-4, 1e-4, "B3")
    outB4 = jax.block_until_ready(fnB(xB4, wB, bB))
    check(outB4, _reference(xB4, wB, bB, num_modes=num_modes_b,
                            feat_dim=feat_dim_b), 1e-4, 1e-4, "B4")

    # ---- bf16 activations/weights (HBM-traffic win on v6e/v7x) --------------
    fnC = jax.jit(functools.partial(mm_shared_mid, num_modes=num_modes_b,
                                    feat_dim=feat_dim_b))
    outC = jax.block_until_ready(fnC(xB3.astype(jnp.bfloat16),
                                     wB.astype(jnp.bfloat16),
                                     bB.astype(jnp.bfloat16)))
    refC = _reference(xB3, wB, bB, num_modes=num_modes_b, feat_dim=feat_dim_b)
    check(outC, refC, 5e-2, 5e-2, "C3")

    print("KERNEL_OK")
</pallas_src>

<mosaic_0001>
module attributes {stable_mosaic.version = 11 : i64} {
  func.func @_wx_group_kernel(%arg0: i32, %arg1: memref<4x32x8xf32, #tpu.memory_space<vmem>>, %arg2: memref<32x32xf32, #tpu.memory_space<vmem>>, %arg3: memref<32x1xf32, #tpu.memory_space<vmem>>, %arg4: memref<4x32x8xf32, #tpu.memory_space<vmem>>) attributes {dimension_semantics = [#tpu.dimension_semantics<parallel>], iteration_bounds = array<i64: 1>, scalar_prefetch = 0 : i64, scratch_operands = 0 : i64, tpu.core_type = #tpu.core_type<tc>, window_params = [{transform_indices = @transform_0, window_bounds = array<i64: 4, 32, 8>}, {pipeline_mode = #tpu.pipeline_mode<synchronous>, transform_indices = @transform_1, window_bounds = array<i64: 32, 32>}, {pipeline_mode = #tpu.pipeline_mode<synchronous>, transform_indices = @transform_2, window_bounds = array<i64: 32, 1>}, {transform_indices = @transform_3, window_bounds = array<i64: 4, 32, 8>}]} {
    %c0 = arith.constant 0 : index
    %c0_0 = arith.constant 0 : index
    %0 = vector.load %arg2[%c0, %c0_0] : memref<32x32xf32, #tpu.memory_space<vmem>>, vector<32x32xf32>
    %c0_1 = arith.constant 0 : index
    %c0_2 = arith.constant 0 : index
    %1 = vector.load %arg3[%c0_1, %c0_2] : memref<32x1xf32, #tpu.memory_space<vmem>>, vector<32x1xf32>
    %c0_3 = arith.constant 0 : index
    %c0_4 = arith.constant 0 : index
    %c0_5 = arith.constant 0 : index
    %2 = vector.load %arg1[%c0_3, %c0_4, %c0_5] : memref<4x32x8xf32, #tpu.memory_space<vmem>>, vector<1x32x8xf32>
    %3 = vector.shape_cast %2 : vector<1x32x8xf32> to vector<32x8xf32>
    %cst = arith.constant dense<0.000000e+00> : vector<32x8xf32>
    %4 = tpu.matmul %0, %3, %cst {dimension_numbers = #tpu.dot_dimension_numbers<[1], [0], [0], [1], [0, 0, 1, 1], [], []>} : vector<32x32xf32>, vector<32x8xf32>, vector<32x8xf32> -> vector<32x8xf32>
    %5 = vector.broadcast %1 : vector<32x1xf32> to vector<32x8xf32>
    %6 = arith.addf %4, %5 : vector<32x8xf32>
    %cst_6 = arith.constant 5.000000e-01 : f32
    %7 = vector.broadcast %cst_6 : f32 to vector<32x8xf32>
    %8 = arith.mulf %7, %6 : vector<32x8xf32>
    %cst_7 = arith.constant 0.707106769 : f32
    %9 = vector.broadcast %cst_7 : f32 to vector<32x8xf32>
    %10 = arith.mulf %6, %9 : vector<32x8xf32>
    %11 = math.erf %10 : vector<32x8xf32>
    %cst_8 = arith.constant 1.000000e+00 : f32
    %12 = vector.broadcast %cst_8 : f32 to vector<32x8xf32>
    %13 = arith.addf %12, %11 : vector<32x8xf32>
    %14 = arith.mulf %8, %13 : vector<32x8xf32>
    %c0_9 = arith.constant 0 : index
    %c0_10 = arith.constant 0 : index
    %c0_11 = arith.constant 0 : index
    %15 = vector.load %arg4[%c0_9, %c0_10, %c0_11] : memref<4x32x8xf32, #tpu.memory_space<vmem>>, vector<1x32x8xf32>
    %16 = vector.shape_cast %15 : vector<1x32x8xf32> to vector<32x8xf32>
    %17 = vector.shape_cast %14 : vector<32x8xf32> to vector<1x32x8xf32>
    tpu.vector_store %arg4[%c0_9, %c0_10, %c0_11], %17 {strides = array<i32>} : memref<4x32x8xf32, #tpu.memory_space<vmem>>, vector<1x32x8xf32>,
    %c1 = arith.constant 1 : index
    %c0_12 = arith.constant 0 : index
    %c0_13 = arith.constant 0 : index
    %18 = vector.load %arg1[%c1, %c0_12, %c0_13] : memref<4x32x8xf32, #tpu.memory_space<vmem>>, vector<1x32x8xf32>
    %19 = vector.shape_cast %18 : vector<1x32x8xf32> to vector<32x8xf32>
    %cst_14 = arith.constant dense<0.000000e+00> : vector<32x8xf32>
    %20 = tpu.matmul %0, %19, %cst_14 {dimension_numbers = #tpu.dot_dimension_numbers<[1], [0], [0], [1], [0, 0, 1, 1], [], []>} : vector<32x32xf32>, vector<32x8xf32>, vector<32x8xf32> -> vector<32x8xf32>
    %21 = vector.broadcast %1 : vector<32x1xf32> to vector<32x8xf32>
    %22 = arith.addf %20, %21 : vector<32x8xf32>
    %cst_15 = arith.constant 5.000000e-01 : f32
    %23 = vector.broadcast %cst_15 : f32 to vector<32x8xf32>
    %24 = arith.mulf %23, %22 : vector<32x8xf32>
    %cst_16 = arith.constant 0.707106769 : f32
    %25 = vector.broadcast %cst_16 : f32 to vector<32x8xf32>
    %26 = arith.mulf %22, %25 : vector<32x8xf32>
    %27 = math.erf %26 : vector<32x8xf32>
    %cst_17 = arith.constant 1.000000e+00 : f32
    %28 = vector.broadcast %cst_17 : f32 to vector<32x8xf32>
    %29 = arith.addf %28, %27 : vector<32x8xf32>
    %30 = arith.mulf %24, %29 : vector<32x8xf32>
    %c1_18 = arith.constant 1 : index
    %c0_19 = arith.constant 0 : index
    %c0_20 = arith.constant 0 : index
    %31 = vector.load %arg4[%c1_18, %c0_19, %c0_20] : memref<4x32x8xf32, #tpu.memory_space<vmem>>, vector<1x32x8xf32>
    %32 = vector.shape_cast %31 : vector<1x32x8xf32> to vector<32x8xf32>
    %33 = vector.shape_cast %30 : vector<32x8xf32> to vector<1x32x8xf32>
    tpu.vector_store %arg4[%c1_18, %c0_19, %c0_20], %33 {strides = array<i32>} : memref<4x32x8xf32, #tpu.memory_space<vmem>>, vector<1x32x8xf32>,
    %c2 = arith.constant 2 : index
    %c0_21 = arith.constant 0 : index
    %c0_22 = arith.constant 0 : index
    %34 = vector.load %arg1[%c2, %c0_21, %c0_22] : memref<4x32x8xf32, #tpu.memory_space<vmem>>, vector<1x32x8xf32>
    %35 = vector.shape_cast %34 : vector<1x32x8xf32> to vector<32x8xf32>
    %cst_23 = arith.constant dense<0.000000e+00> : vector<32x8xf32>
    %36 = tpu.matmul %0, %35, %cst_23 {dimension_numbers = #tpu.dot_dimension_numbers<[1], [0], [0], [1], [0, 0, 1, 1], [], []>} : vector<32x32xf32>, vector<32x8xf32>, vector<32x8xf32> -> vector<32x8xf32>
    %37 = vector.broadcast %1 : vector<32x1xf32> to vector<32x8xf32>
    %38 = arith.addf %36, %37 : vector<32x8xf32>
    %cst_24 = arith.constant 5.000000e-01 : f32
    %39 = vector.broadcast %cst_24 : f32 to vector<32x8xf32>
    %40 = arith.mulf %39, %38 : vector<32x8xf32>
    %cst_25 = arith.constant 0.707106769 : f32
    %41 = vector.broadcast %cst_25 : f32 to vector<32x8xf32>
    %42 = arith.mulf %38, %41 : vector<32x8xf32>
    %43 = math.erf %42 : vector<32x8xf32>
    %cst_26 = arith.constant 1.000000e+00 : f32
    %44 = vector.broadcast %cst_26 : f32 to vector<32x8xf32>
    %45 = arith.addf %44, %43 : vector<32x8xf32>
    %46 = arith.mulf %40, %45 : vector<32x8xf32>
    %c2_27 = arith.constant 2 : index
    %c0_28 = arith.constant 0 : index
    %c0_29 = arith.constant 0 : index
    %47 = vector.load %arg4[%c2_27, %c0_28, %c0_29] : memref<4x32x8xf32, #tpu.memory_space<vmem>>, vector<1x32x8xf32>
    %48 = vector.shape_cast %47 : vector<1x32x8xf32> to vector<32x8xf32>
    %49 = vector.shape_cast %46 : vector<32x8xf32> to vector<1x32x8xf32>
    tpu.vector_store %arg4[%c2_27, %c0_28, %c0_29], %49 {strides = array<i32>} : memref<4x32x8xf32, #tpu.memory_space<vmem>>, vector<1x32x8xf32>,
    %c3 = arith.constant 3 : index
    %c0_30 = arith.constant 0 : index
    %c0_31 = arith.constant 0 : index
    %50 = vector.load %arg1[%c3, %c0_30, %c0_31] : memref<4x32x8xf32, #tpu.memory_space<vmem>>, vector<1x32x8xf32>
    %51 = vector.shape_cast %50 : vector<1x32x8xf32> to vector<32x8xf32>
    %cst_32 = arith.constant dense<0.000000e+00> : vector<32x8xf32>
    %52 = tpu.matmul %0, %51, %cst_32 {dimension_numbers = #tpu.dot_dimension_numbers<[1], [0], [0], [1], [0, 0, 1, 1], [], []>} : vector<32x32xf32>, vector<32x8xf32>, vector<32x8xf32> -> vector<32x8xf32>
    %53 = vector.broadcast %1 : vector<32x1xf32> to vector<32x8xf32>
    %54 = arith.addf %52, %53 : vector<32x8xf32>
    %cst_33 = arith.constant 5.000000e-01 : f32
    %55 = vector.broadcast %cst_33 : f32 to vector<32x8xf32>
    %56 = arith.mulf %55, %54 : vector<32x8xf32>
    %cst_34 = arith.constant 0.707106769 : f32
    %57 = vector.broadcast %cst_34 : f32 to vector<32x8xf32>
    %58 = arith.mulf %54, %57 : vector<32x8xf32>
    %59 = math.erf %58 : vector<32x8xf32>
    %cst_35 = arith.constant 1.000000e+00 : f32
    %60 = vector.broadcast %cst_35 : f32 to vector<32x8xf32>
    %61 = arith.addf %60, %59 : vector<32x8xf32>
    %62 = arith.mulf %56, %61 : vector<32x8xf32>
    %c3_36 = arith.constant 3 : index
    %c0_37 = arith.constant 0 : index
    %c0_38 = arith.constant 0 : index
    %63 = vector.load %arg4[%c3_36, %c0_37, %c0_38] : memref<4x32x8xf32, #tpu.memory_space<vmem>>, vector<1x32x8xf32>
    %64 = vector.shape_cast %63 : vector<1x32x8xf32> to vector<32x8xf32>
    %65 = vector.shape_cast %62 : vector<32x8xf32> to vector<1x32x8xf32>
    tpu.vector_store %arg4[%c3_36, %c0_37, %c0_38], %65 {strides = array<i32>} : memref<4x32x8xf32, #tpu.memory_space<vmem>>, vector<1x32x8xf32>,
    return
  }
  func.func @transform_0(%arg0: i32) -> (i32, i32, i32) {
    %c0_i32 = arith.constant 0 : i32
    %c0_i32_0 = arith.constant 0 : i32
    %c0_i32_1 = arith.constant 0 : i32
    return %arg0, %c0_i32, %c0_i32_0 : i32, i32, i32
  }
  func.func @transform_1(%arg0: i32) -> (i32, i32) {
    %c0_i32 = arith.constant 0 : i32
    %c0_i32_0 = arith.constant 0 : i32
    %c0_i32_1 = arith.constant 0 : i32
    return %c0_i32, %c0_i32_0 : i32, i32
  }
  func.func @transform_2(%arg0: i32) -> (i32, i32) {
    %c0_i32 = arith.constant 0 : i32
    %c0_i32_0 = arith.constant 0 : i32
    %c0_i32_1 = arith.constant 0 : i32
    return %c0_i32, %c0_i32_0 : i32, i32
  }
  func.func @transform_3(%arg0: i32) -> (i32, i32, i32) {
    %c0_i32 = arith.constant 0 : i32
    %c0_i32_0 = arith.constant 0 : i32
    %c0_i32_1 = arith.constant 0 : i32
    return %arg0, %c0_i32, %c0_i32_0 : i32, i32, i32
  }
}

</mosaic_0001>

<llo_original>
// kernel: mm_shared_mid.1
$region0: #{mm_shared_mid.1}
  #allocation0 [shape = 'u32[]', space=smem, size = 0x4, offset = 0x4, fixed_abs, tag = 'smem constant byte address 0x4 - core index']
  #allocation1 [shape = 'u32[144,128]{1,0:T(1,128)}', space=vmem, size = 0x12000, scoped, tag = 'internal scratch']
  %s0 = inlined_call_operand.vmem [shape: f32[4,32,8], index: 0, kind: input, shape index: {}]
  %s1 = inlined_call_operand.vmem [shape: f32[32,32], index: 1, kind: input, shape index: {}]
  %s2 = inlined_call_operand.vmem [shape: f32[32,1], index: 2, kind: input, shape index: {}]
  %s3 = inlined_call_operand.vmem [shape: f32[4,32,8], index: 3, kind: output, shape index: {}]
  %s4 = sld [smem:[#allocation0]]
  $region22: #{mm_shared_mid.1} parent=0
    _
  %s6 = ssub.s32 1, %s4
  %s7 = scalar_select 0, %s6, %s4
  // Predicated region
  $region2: #{mm_shared_mid.1} parent=0 // pred_check
    _
  $region3: #{mm_shared_mid.1} parent=0 // pred_check_branch
    %9 = sbr.rel (0) target = $region5
  $region4: #{mm_shared_mid.1} parent=0 // pred_region
    _
  $region5: #{mm_shared_mid.1} parent=0 // pred_fallthru
    _
  // Predicated region
  $region6: #{mm_shared_mid.1} parent=0 // pred_check
    _
  $region7: #{mm_shared_mid.1} parent=0 // pred_check_branch
    %11 = sbr.rel (0) target = $region9
  $region8: #{mm_shared_mid.1} parent=0 // pred_region
    _
  $region9: #{mm_shared_mid.1} parent=0 // pred_fallthru
    _
  // Predicated region
  $region10: #{mm_shared_mid.1} parent=0 // pred_check
    _
  $region11: #{mm_shared_mid.1} parent=0 // pred_check_branch
    %13 = sbr.rel (0) target = $region13
  $region12: #{mm_shared_mid.1} parent=0 // pred_region
    _
  $region13: #{mm_shared_mid.1} parent=0 // pred_fallthru
    _
  %v14 = vld [vmem:[%s1] sm:$0xff]
  %v15 = vld [vmem:[%s1 + $0x8] sm:$0xff]
  %v16 = vld [vmem:[%s1 + $0x10] sm:$0xff]
  %v17 = vld [vmem:[%s1 + $0x18] sm:$0xff]
  %v18 = vld [vmem:[%s2] sm:$0xff]
  %v19 = vld [vmem:[%s2 + $0x8] sm:$0xff]
  %v20 = vld [vmem:[%s2 + $0x10] sm:$0xff]
  %v21 = vld [vmem:[%s2 + $0x18] sm:$0xff]
  %v22 = vld [vmem:[%s0] sm:$0xff]
  %v23 = vld [vmem:[%s0 + $0x8] sm:$0xff]
  %v24 = vld [vmem:[%s0 + $0x10] sm:$0xff]
  %v25 = vld [vmem:[%s0 + $0x18] sm:$0xff]
  %27 = vset.pattern.permute.xlu0 0
  %28 = vperm.xlu0 %27, %v18
  %v29 = vpop.permute.xlu0 %28
  %32 = vset.pattern.permute.xlu0 0
  %33 = vperm.xlu0 %32, %v19
  %v34 = vpop.permute.xlu0 %33
  %37 = vset.pattern.permute.xlu0 0
  %38 = vperm.xlu0 %37, %v20
  %v39 = vpop.permute.xlu0 %38
  %42 = vset.pattern.permute.xlu0 0
  %43 = vperm.xlu0 %42, %v21
  %v44 = vpop.permute.xlu0 %43
  %vm46 = vcmask 261120
  %v48 = vsel %vm46, %v14, 0
  %v51 = vsel %vm46, %v15, 0
  %v54 = vsel %vm46, %v16, 0
  %v57 = vsel %vm46, %v17, 0
  %59 = vmatprep.subr.mxu0 0.0
  %60 = vmatpush1.msra.mxu0 %v22
  %61 = vmatprep.subr.mxu0 0.0
  %62 = vmatpush1.msra.mxu0 %v23
  %63 = vmatprep.subr.mxu0 0.0
  %64 = vmatpush1.msra.mxu0 %v24
  %65 = vmatprep.subr.mxu0 0.0
  %66 = vmatpush1.msra.mxu0 %v25
  %67 = vmatprep.subr.mxu0 0.0
  %68 = vmatpush1.msra.mxu0 0.0
  %69 = vmatprep.subr.mxu0 0.0
  %70 = vmatpush1.msra.mxu0 0.0
  %71 = vmatprep.subr.mxu0 0.0
  %72 = vmatpush1.msra.mxu0 0.0
  %73 = vmatprep.subr.mxu0 0.0
  %74 = vmatpush1.msra.mxu0 0.0
  %75 = vmatprep.subr.mxu0 0.0
  %76 = vmatpush1.msra.mxu0 0.0
  %77 = vmatprep.subr.mxu0 0.0
  %78 = vmatpush1.msra.mxu0 0.0
  %79 = vmatprep.subr.mxu0 0.0
  %80 = vmatpush1.msra.mxu0 0.0
  %81 = vmatprep.subr.mxu0 0.0
  %82 = vmatpush1.msra.mxu0 0.0
  %83 = vmatprep.subr.mxu0 0.0
  %84 = vmatpush1.msra.mxu0 0.0
  %85 = vmatprep.subr.mxu0 0.0
  %86 = vmatpush1.msra.mxu0 0.0
  %87 = vmatprep.subr.mxu0 0.0
  %88 = vmatpush1.msra.mxu0 0.0
  %89 = vmatprep.subr.mxu0 0.0
  %90 = vmatpush1.msra.mxu0 0.0
  %91 = vmatprep.subr.mxu0 0.0
  %92 = vmatpush1.msra.mxu0 0.0
  %93 = vmatprep.subr.mxu0 0.0
  %94 = vmatpush1.msra.mxu0 0.0
  %95 = vmatprep.subr.mxu0 0.0
  %96 = vmatpush1.msra.mxu0 0.0
  %97 = vmatprep.subr.mxu0 0.0
  %98 = vmatpush1.msra.mxu0 0.0
  %99 = vmatprep.subr.mxu0 0.0
  %100 = vmatpush1.msra.mxu0 0.0
  %101 = vmatprep.subr.mxu0 0.0
  %102 = vmatpush1.msra.mxu0 0.0
  %103 = vmatprep.subr.mxu0 0.0
  %104 = vmatpush1.msra.mxu0 0.0
  %105 = vmatprep.subr.mxu0 0.0
  %106 = vmatpush1.msra.mxu0 0.0
  %107 = vmatprep.subr.mxu0 0.0
  %108 = vmatpush1.msra.mxu0 0.0
  %109 = vmatprep.subr.mxu0 0.0
  %110 = vmatpush1.msra.mxu0 0.0
  %111 = vmatprep.subr.mxu0 0.0
  %112 = vmatpush1.msra.mxu0 0.0
  %113 = vmatprep.subr.mxu0 0.0
  %114 = vmatpush1.msra.mxu0 0.0
  %115 = vmatprep.subr.mxu0 0.0
  %116 = vmatpush1.msra.mxu0 0.0
  %117 = vmatprep.subr.mxu0 0.0
  %118 = vmatpush1.msra.mxu0 0.0
  %119 = vmatprep.subr.mxu0 0.0
  %120 = vmatpush1.msra.mxu0 0.0
  %121 = vmatprep.subr.mxu0 0.0
  %122 = vmatpush1.msra.mxu0 0.0
  %123 = vmatprep.mubr.f32.mxu0 0.0
  %124 = vmatmul.mubr.f32.gmra.mrb[0].mxu0 %v48
  %v125 = vpop.f32.mrb[0].mxu0
  %v126 = vadd.f32 %v29, %v125
  %v127 = vpop.f32.mrb[0].mxu0
  %128 = vmatprep.mubr.f32.mxu0 0.0
  %129 = vmatmul.mubr.f32.gmra.mrb[0].mxu0 %v51
  %v130 = vpop.f32.mrb[0].mxu0
  %v131 = vadd.f32 %v34, %v130
  %v132 = vpop.f32.mrb[0].mxu0
  %133 = vmatprep.mubr.f32.mxu0 0.0
  %134 = vmatmul.mubr.f32.gmra.mrb[0].mxu0 %v54
  %v135 = vpop.f32.mrb[0].mxu0
  %v136 = vadd.f32 %v39, %v135
  %v137 = vpop.f32.mrb[0].mxu0
  %138 = vmatprep.mubr.f32.mxu0 0.0
  %139 = vmatmul.mubr.f32.gmra.mrb[0].mxu0 %v57
  %v140 = vpop.f32.mrb[0].mxu0
  %v141 = vadd.f32 %v44, %v140
  %v142 = vpop.f32.mrb[0].mxu0
  %143 = vdwg.mxu0
  %v144 = vmul.f32 %v126, 0.5
  %v145 = vmul.f32 %v131, 0.5
  %v146 = vmul.f32 %v136, 0.5
  %v147 = vmul.f32 %v141, 0.5
  %v148 = vmul.f32 %v126, 0.70710677
  %v149 = vmul.f32 %v131, 0.70710677
  %v150 = vmul.f32 %v136, 0.70710677
  %v151 = vmul.f32 %v141, 0.70710677
  %v152 = verf.f32.pop %v148
  %v153 = verf.f32.pop %v149
  %v154 = verf.f32.pop %v150
  %v155 = verf.f32.pop %v151
  %v156 = vadd.f32 %v152, 1.0
  %v157 = vadd.f32 %v153, 1.0
  %v158 = vadd.f32 %v154, 1.0
  %v159 = vadd.f32 %v155, 1.0
  %v160 = vmul.f32 %v144, %v156
  %v161 = vmul.f32 %v145, %v157
  %v162 = vmul.f32 %v146, %v158
  %v163 = vmul.f32 %v147, %v159
  %vm164 = vcmask 64512
  %165 = vst.msk [vmem:[%s3] sm:$0xff] %vm164, %v160
  %166 = vst.msk [vmem:[%s3 + $0x8] sm:$0xff] %vm164, %v161
  %167 = vst.msk [vmem:[%s3 + $0x10] sm:$0xff] %vm164, %v162
  %168 = vst.msk [vmem:[%s3 + $0x18] sm:$0xff] %vm164, %v163
  %s169 = scalar_lea.vmem %s0, 32
  %v170 = vld [vmem:[%s169] sm:$0xff]
  %v171 = vld [vmem:[%s169 + $0x8] sm:$0xff]
  %v172 = vld [vmem:[%s169 + $0x10] sm:$0xff]
  %v173 = vld [vmem:[%s169 + $0x18] sm:$0xff]
  %174 = vmatprep.subr.mxu0 0.0
  %175 = vmatpush1.msra.mxu0 %v170
  %176 = vmatprep.subr.mxu0 0.0
  %177 = vmatpush1.msra.mxu0 %v171
  %178 = vmatprep.subr.mxu0 0.0
  %179 = vmatpush1.msra.mxu0 %v172
  %180 = vmatprep.subr.mxu0 0.0
  %181 = vmatpush1.msra.mxu0 %v173
  %182 = vmatprep.subr.mxu0 0.0
  %183 = vmatpush1.msra.mxu0 0.0
  %184 = vmatprep.subr.mxu0 0.0
  %185 = vmatpush1.msra.mxu0 0.0
  %186 = vmatprep.subr.mxu0 0.0
  %187 = vmatpush1.msra.mxu0 0.0
  %188 = vmatprep.subr.mxu0 0.0
  %189 = vmatpush1.msra.mxu0 0.0
  %190 = vmatprep.subr.mxu0 0.0
  %191 = vmatpush1.msra.mxu0 0.0
  %192 = vmatprep.subr.mxu0 0.0
  %193 = vmatpush1.msra.mxu0 0.0
  %194 = vmatprep.subr.mxu0 0.0
  %195 = vmatpush1.msra.mxu0 0.0
  %196 = vmatprep.subr.mxu0 0.0
  %197 = vmatpush1.msra.mxu0 0.0
  %198 = vmatprep.subr.mxu0 0.0
  %199 = vmatpush1.msra.mxu0 0.0
  %200 = vmatprep.subr.mxu0 0.0
  %201 = vmatpush1.msra.mxu0 0.0
  %202 = vmatprep.subr.mxu0 0.0
  %203 = vmatpush1.msra.mxu0 0.0
  %204 = vmatprep.subr.mxu0 0.0
  %205 = vmatpush1.msra.mxu0 0.0
  %206 = vmatprep.subr.mxu0 0.0
  %207 = vmatpush1.msra.mxu0 0.0
  %208 = vmatprep.subr.mxu0 0.0
  %209 = vmatpush1.msra.mxu0 0.0
  %210 = vmatprep.subr.mxu0 0.0
  %211 = vmatpush1.msra.mxu0 0.0
  %212 = vmatprep.subr.mxu0 0.0
  %213 = vmatpush1.msra.mxu0 0.0
  %214 = vmatprep.subr.mxu0 0.0
  %215 = vmatpush1.msra.mxu0 0.0
  %216 = vmatprep.subr.mxu0 0.0
  %217 = vmatpush1.msra.mxu0 0.0
  %218 = vmatprep.subr.mxu0 0.0
  %219 = vmatpush1.msra.mxu0 0.0
  %220 = vmatprep.subr.mxu0 0.0
  %221 = vmatpush1.msra.mxu0 0.0
  %222 = vmatprep.subr.mxu0 0.0
  %223 = vmatpush1.msra.mxu0 0.0
  %224 = vmatprep.subr.mxu0 0.0
  %225 = vmatpush1.msra.mxu0 0.0
  %226 = vmatprep.subr.mxu0 0.0
  %227 = vmatpush1.msra.mxu0 0.0
  %228 = vmatprep.subr.mxu0 0.0
  %229 = vmatpush1.msra.mxu0 0.0
  %230 = vmatprep.subr.mxu0 0.0
  %231 = vmatpush1.msra.mxu0 0.0
  %232 = vmatprep.subr.mxu0 0.0
  %233 = vmatpush1.msra.mxu0 0.0
  %234 = vmatprep.subr.mxu0 0.0
  %235 = vmatpush1.msra.mxu0 0.0
  %236 = vmatprep.subr.mxu0 0.0
  %237 = vmatpush1.msra.mxu0 0.0
  %238 = vmatprep.mubr.f32.mxu0 0.0
  %239 = vmatmul.mubr.f32.gmra.mrb[0].mxu0 %v48
  %v240 = vpop.f32.mrb[0].mxu0
  %v241 = vadd.f32 %v29, %v240
  %v242 = vpop.f32.mrb[0].mxu0
  %243 = vmatprep.mubr.f32.mxu0 0.0
  %244 = vmatmul.mubr.f32.gmra.mrb[0].mxu0 %v51
  %v245 = vpop.f32.mrb[0].mxu0
  %v246 = vadd.f32 %v34, %v245
  %v247 = vpop.f32.mrb[0].mxu0
  %248 = vmatprep.mubr.f32.mxu0 0.0
  %249 = vmatmul.mubr.f32.gmra.mrb[0].mxu0 %v54
  %v250 = vpop.f32.mrb[0].mxu0
  %v251 = vadd.f32 %v39, %v250
  %v252 = vpop.f32.mrb[0].mxu0
  %253 = vmatprep.mubr.f32.mxu0 0.0
  %254 = vmatmul.mubr.f32.gmra.mrb[0].mxu0 %v57
  %v255 = vpop.f32.mrb[0].mxu0
  %v256 = vadd.f32 %v44, %v255
  %v257 = vpop.f32.mrb[0].mxu0
  %258 = vdwg.mxu0
  %v259 = vmul.f32 %v241, 0.5
  %v260 = vmul.f32 %v246, 0.5
  %v261 = vmul.f32 %v251, 0.5
  %v262 = vmul.f32 %v256, 0.5
  %v263 = vmul.f32 %v241, 0.70710677
  %v264 = vmul.f32 %v246, 0.70710677
  %v265 = vmul.f32 %v251, 0.70710677
  %v266 = vmul.f32 %v256, 0.70710677
  %v267 = verf.f32.pop %v263
  %v268 = verf.f32.pop %v264
  %v269 = verf.f32.pop %v265
  %v270 = verf.f32.pop %v266
  %v271 = vadd.f32 %v267, 1.0
  %v272 = vadd.f32 %v268, 1.0
  %v273 = vadd.f32 %v269, 1.0
  %v274 = vadd.f32 %v270, 1.0
  %v275 = vmul.f32 %v259, %v271
  %v276 = vmul.f32 %v260, %v272
  %v277 = vmul.f32 %v261, %v273
  %v278 = vmul.f32 %v262, %v274
  %s279 = scalar_lea.vmem %s3, 32
  %280 = vst.msk [vmem:[%s279] sm:$0xff] %vm164, %v275
  %281 = vst.msk [vmem:[%s279 + $0x8] sm:$0xff] %vm164, %v276
  %282 = vst.msk [vmem:[%s279 + $0x10] sm:$0xff] %vm164, %v277
  %283 = vst.msk [vmem:[%s279 + $0x18] sm:$0xff] %vm164, %v278
  %s284 = scalar_lea.vmem %s0, 64
  %v285 = vld [vmem:[%s284] sm:$0xff]
  %v286 = vld [vmem:[%s284 + $0x8] sm:$0xff]
  %v287 = vld [vmem:[%s284 + $0x10] sm:$0xff]
  %v288 = vld [vmem:[%s284 + $0x18] sm:$0xff]
  %289 = vmatprep.subr.mxu0 0.0
  %290 = vmatpush1.msra.mxu0 %v285
  %291 = vmatprep.subr.mxu0 0.0
  %292 = vmatpush1.msra.mxu0 %v286
  %293 = vmatprep.subr.mxu0 0.0
  %294 = vmatpush1.msra.mxu0 %v287
  %295 = vmatprep.subr.mxu0 0.0
  %296 = vmatpush1.msra.mxu0 %v288
  %297 = vmatprep.subr.mxu0 0.0
  %298 = vmatpush1.msra.mxu0 0.0
  %299 = vmatprep.subr.mxu0 0.0
  %300 = vmatpush1.msra.mxu0 0.0
  %301 = vmatprep.subr.mxu0 0.0
  %302 = vmatpush1.msra.mxu0 0.0
  %303 = vmatprep.subr.mxu0 0.0
  %304 = vmatpush1.msra.mxu0 0.0
  %305 = vmatprep.subr.mxu0 0.0
  %306 = vmatpush1.msra.mxu0 0.0
  %307 = vmatprep.subr.mxu0 0.0
  %308 = vmatpush1.msra.mxu0 0.0
  %309 = vmatprep.subr.mxu0 0.0
  %310 = vmatpush1.msra.mxu0 0.0
  %311 = vmatprep.subr.mxu0 0.0
  %312 = vmatpush1.msra.mxu0 0.0
  %313 = vmatprep.subr.mxu0 0.0
  %314 = vmatpush1.msra.mxu0 0.0
  %315 = vmatprep.subr.mxu0 0.0
  %316 = vmatpush1.msra.mxu0 0.0
  %317 = vmatprep.subr.mxu0 0.0
  %318 = vmatpush1.msra.mxu0 0.0
  %319 = vmatprep.subr.mxu0 0.0
  %320 = vmatpush1.msra.mxu0 0.0
  %321 = vmatprep.subr.mxu0 0.0
  %322 = vmatpush1.msra.mxu0 0.0
  %323 = vmatprep.subr.mxu0 0.0
  %324 = vmatpush1.msra.mxu0 0.0
  %325 = vmatprep.subr.mxu0 0.0
  %326 = vmatpush1.msra.mxu0 0.0
  %327 = vmatprep.subr.mxu0 0.0
  %328 = vmatpush1.msra.mxu0 0.0
  %329 = vmatprep.subr.mxu0 0.0
  %330 = vmatpush1.msra.mxu0 0.0
  %331 = vmatprep.subr.mxu0 0.0
  %332 = vmatpush1.msra.mxu0 0.0
  %333 = vmatprep.subr.mxu0 0.0
  %334 = vmatpush1.msra.mxu0 0.0
  %335 = vmatprep.subr.mxu0 0.0
  %336 = vmatpush1.msra.mxu0 0.0
  %337 = vmatprep.subr.mxu0 0.0
  %338 = vmatpush1.msra.mxu0 0.0
  %339 = vmatprep.subr.mxu0 0.0
  %340 = vmatpush1.msra.mxu0 0.0
  %341 = vmatprep.subr.mxu0 0.0
  %342 = vmatpush1.msra.mxu0 0.0
  %343 = vmatprep.subr.mxu0 0.0
  %344 = vmatpush1.msra.mxu0 0.0
  %345 = vmatprep.subr.mxu0 0.0
  %346 = vmatpush1.msra.mxu0 0.0
  %347 = vmatprep.subr.mxu0 0.0
  %348 = vmatpush1.msra.mxu0 0.0
  %349 = vmatprep.subr.mxu0 0.0
  %350 = vmatpush1.msra.mxu0 0.0
  %351 = vmatprep.subr.mxu0 0.0
  %352 = vmatpush1.msra.mxu0 0.0
  %353 = vmatprep.mubr.f32.mxu0 0.0
  %354 = vmatmul.mubr.f32.gmra.mrb[0].mxu0 %v48
  %v355 = vpop.f32.mrb[0].mxu0
  %v356 = vadd.f32 %v29, %v355
  %v357 = vpop.f32.mrb[0].mxu0
  %358 = vmatprep.mubr.f32.mxu0 0.0
  %359 = vmatmul.mubr.f32.gmra.mrb[0].mxu0 %v51
  %v360 = vpop.f32.mrb[0].mxu0
  %v361 = vadd.f32 %v34, %v360
  %v362 = vpop.f32.mrb[0].mxu0
  %363 = vmatprep.mubr.f32.mxu0 0.0
  %364 = vmatmul.mubr.f32.gmra.mrb[0].mxu0 %v54
  %v365 = vpop.f32.mrb[0].mxu0
  %v366 = vadd.f32 %v39, %v365
  %v367 = vpop.f32.mrb[0].mxu0
  %368 = vmatprep.mubr.f32.mxu0 0.0
  %369 = vmatmul.mubr.f32.gmra.mrb[0].mxu0 %v57
  %v370 = vpop.f32.mrb[0].mxu0
  %v371 = vadd.f32 %v44, %v370
  %v372 = vpop.f32.mrb[0].mxu0
  %373 = vdwg.mxu0
  %v374 = vmul.f32 %v356, 0.5
  %v375 = vmul.f32 %v361, 0.5
  %v376 = vmul.f32 %v366, 0.5
  %v377 = vmul.f32 %v371, 0.5
  %v378 = vmul.f32 %v356, 0.70710677
  %v379 = vmul.f32 %v361, 0.70710677
  %v380 = vmul.f32 %v366, 0.70710677
  %v381 = vmul.f32 %v371, 0.70710677
  %v382 = verf.f32.pop %v378
  %v383 = verf.f32.pop %v379
  %v384 = verf.f32.pop %v380
  %v385 = verf.f32.pop %v381
  %v386 = vadd.f32 %v382, 1.0
  %v387 = vadd.f32 %v383, 1.0
  %v388 = vadd.f32 %v384, 1.0
  %v389 = vadd.f32 %v385, 1.0
  %v390 = vmul.f32 %v374, %v386
  %v391 = vmul.f32 %v375, %v387
  %v392 = vmul.f32 %v376, %v388
  %v393 = vmul.f32 %v377, %v389
  %s394 = scalar_lea.vmem %s3, 64
  %395 = vst.msk [vmem:[%s394] sm:$0xff] %vm164, %v390
  %396 = vst.msk [vmem:[%s394 + $0x8] sm:$0xff] %vm164, %v391
  %397 = vst.msk [vmem:[%s394 + $0x10] sm:$0xff] %vm164, %v392
  %398 = vst.msk [vmem:[%s394 + $0x18] sm:$0xff] %vm164, %v393
  %s399 = scalar_lea.vmem %s0, 96
  %v400 = vld [vmem:[%s399] sm:$0xff]
  %v401 = vld [vmem:[%s399 + $0x8] sm:$0xff]
  %v402 = vld [vmem:[%s399 + $0x10] sm:$0xff]
  %v403 = vld [vmem:[%s399 + $0x18] sm:$0xff]
  %404 = vmatprep.subr.mxu0 0.0
  %405 = vmatpush1.msra.mxu0 %v400
  %406 = vmatprep.subr.mxu0 0.0
  %407 = vmatpush1.msra.mxu0 %v401
  %408 = vmatprep.subr.mxu0 0.0
  %409 = vmatpush1.msra.mxu0 %v402
  %410 = vmatprep.subr.mxu0 0.0
  %411 = vmatpush1.msra.mxu0 %v403
  %412 = vmatprep.subr.mxu0 0.0
  %413 = vmatpush1.msra.mxu0 0.0
  %414 = vmatprep.subr.mxu0 0.0
  %415 = vmatpush1.msra.mxu0 0.0
  %416 = vmatprep.subr.mxu0 0.0
  %417 = vmatpush1.msra.mxu0 0.0
  %418 = vmatprep.subr.mxu0 0.0
  %419 = vmatpush1.msra.mxu0 0.0
  %420 = vmatprep.subr.mxu0 0.0
  %421 = vmatpush1.msra.mxu0 0.0
  %422 = vmatprep.subr.mxu0 0.0
  %423 = vmatpush1.msra.mxu0 0.0
  %424 = vmatprep.subr.mxu0 0.0
  %425 = vmatpush1.msra.mxu0 0.0
  %426 = vmatprep.subr.mxu0 0.0
  %427 = vmatpush1.msra.mxu0 0.0
  %428 = vmatprep.subr.mxu0 0.0
  %429 = vmatpush1.msra.mxu0 0.0
  %430 = vmatprep.subr.mxu0 0.0
  %431 = vmatpush1.msra.mxu0 0.0
  %432 = vmatprep.subr.mxu0 0.0
  %433 = vmatpush1.msra.mxu0 0.0
  %434 = vmatprep.subr.mxu0 0.0
  %435 = vmatpush1.msra.mxu0 0.0
  %436 = vmatprep.subr.mxu0 0.0
  %437 = vmatpush1.msra.mxu0 0.0
  %438 = vmatprep.subr.mxu0 0.0
  %439 = vmatpush1.msra.mxu0 0.0
  %440 = vmatprep.subr.mxu0 0.0
  %441 = vmatpush1.msra.mxu0 0.0
  %442 = vmatprep.subr.mxu0 0.0
  %443 = vmatpush1.msra.mxu0 0.0
  %444 = vmatprep.subr.mxu0 0.0
  %445 = vmatpush1.msra.mxu0 0.0
  %446 = vmatprep.subr.mxu0 0.0
  %447 = vmatpush1.msra.mxu0 0.0
  %448 = vmatprep.subr.mxu0 0.0
  %449 = vmatpush1.msra.mxu0 0.0
  %450 = vmatprep.subr.mxu0 0.0
  %451 = vmatpush1.msra.mxu0 0.0
  %452 = vmatprep.subr.mxu0 0.0
  %453 = vmatpush1.msra.mxu0 0.0
  %454 = vmatprep.subr.mxu0 0.0
  %455 = vmatpush1.msra.mxu0 0.0
  %456 = vmatprep.subr.mxu0 0.0
  %457 = vmatpush1.msra.mxu0 0.0
  %458 = vmatprep.subr.mxu0 0.0
  %459 = vmatpush1.msra.mxu0 0.0
  %460 = vmatprep.subr.mxu0 0.0
  %461 = vmatpush1.msra.mxu0 0.0
  %462 = vmatprep.subr.mxu0 0.0
  %463 = vmatpush1.msra.mxu0 0.0
  %464 = vmatprep.subr.mxu0 0.0
  %465 = vmatpush1.msra.mxu0 0.0
  %466 = vmatprep.subr.mxu0 0.0
  %467 = vmatpush1.msra.mxu0 0.0
  %468 = vmatprep.mubr.f32.mxu0 0.0
  %469 = vmatmul.mubr.f32.gmra.mrb[0].mxu0 %v48
  %v470 = vpop.f32.mrb[0].mxu0
  %v471 = vadd.f32 %v29, %v470
  %v472 = vpop.f32.mrb[0].mxu0
  %473 = vmatprep.mubr.f32.mxu0 0.0
  %474 = vmatmul.mubr.f32.gmra.mrb[0].mxu0 %v51
  %v475 = vpop.f32.mrb[0].mxu0
  %v476 = vadd.f32 %v34, %v475
  %v477 = vpop.f32.mrb[0].mxu0
  %478 = vmatprep.mubr.f32.mxu0 0.0
  %479 = vmatmul.mubr.f32.gmra.mrb[0].mxu0 %v54
  %v480 = vpop.f32.mrb[0].mxu0
  %v481 = vadd.f32 %v39, %v480
  %v482 = vpop.f32.mrb[0].mxu0
  %483 = vmatprep.mubr.f32.mxu0 0.0
  %484 = vmatmul.mubr.f32.gmra.mrb[0].mxu0 %v57
  %v485 = vpop.f32.mrb[0].mxu0
  %v486 = vadd.f32 %v44, %v485
  %v487 = vpop.f32.mrb[0].mxu0
  %488 = vdwg.mxu0
  %v489 = vmul.f32 %v471, 0.5
  %v490 = vmul.f32 %v476, 0.5
  %v491 = vmul.f32 %v481, 0.5
  %v492 = vmul.f32 %v486, 0.5
  %v493 = vmul.f32 %v471, 0.70710677
  %v494 = vmul.f32 %v476, 0.70710677
  %v495 = vmul.f32 %v481, 0.70710677
  %v496 = vmul.f32 %v486, 0.70710677
  %v497 = verf.f32.pop %v493
  %v498 = verf.f32.pop %v494
  %v499 = verf.f32.pop %v495
  %v500 = verf.f32.pop %v496
  %v501 = vadd.f32 %v497, 1.0
  %v502 = vadd.f32 %v498, 1.0
  %v503 = vadd.f32 %v499, 1.0
  %v504 = vadd.f32 %v500, 1.0
  %v505 = vmul.f32 %v489, %v501
  %v506 = vmul.f32 %v490, %v502
  %v507 = vmul.f32 %v491, %v503
  %v508 = vmul.f32 %v492, %v504
  %s509 = scalar_lea.vmem %s3, 96
  %510 = vst.msk [vmem:[%s509] sm:$0xff] %vm164, %v505
  %511 = vst.msk [vmem:[%s509 + $0x8] sm:$0xff] %vm164, %v506
  %512 = vst.msk [vmem:[%s509 + $0x10] sm:$0xff] %vm164, %v507
  %513 = vst.msk [vmem:[%s509 + $0x18] sm:$0xff] %vm164, %v508
  // Predicated region
  $region14: #{mm_shared_mid.1} parent=0 // pred_check
    _
  $region15: #{mm_shared_mid.1} parent=0 // pred_check_branch
    %515 = sbr.rel (0) target = $region17
  $region16: #{mm_shared_mid.1} parent=0 // pred_region
    _
  $region17: #{mm_shared_mid.1} parent=0 // pred_fallthru
    _
  // Predicated region
  $region18: #{mm_shared_mid.1} parent=0 // pred_check
    _
  $region19: #{mm_shared_mid.1} parent=0 // pred_check_branch
    %517 = sbr.rel (0) target = $region21
  $region20: #{mm_shared_mid.1} parent=0 // pred_region
    _
  $region21: #{mm_shared_mid.1} parent=0 // pred_fallthru
    _

</llo_original>
